<compile_context>
chip_gen: v6e
topology: v6e:2x2x1
jax: 0.10.0
libtpu: 0.0.40
codegen_flags: <defaults>
</compile_context>

<pallas_src>
import jax
import jax.numpy as jnp
from jax.experimental import pallas as pl
from jax.experimental.pallas import tpu as pltpu

# PyTorch nn.Linear layout: (out_features, in_features) per layer.
_DIMS = [(64, 23), (128, 64), (32, 128), (16, 32), (1, 16)]
_CN = 256        # inner lane chunk: keeps the per-chunk layer chain register-resident
_MAX_TN = 2048   # grid-level batch tile (lanes); multiple of _CN


def _round_up(v, m):
    return ((v + m - 1) // m) * m


def _choose_tn(B):
    """Batch tile: >= 4 grid steps for megacore + pipelining, capped padding."""
    if B <= _CN:
        return _round_up(B, 128)
    tn = _round_up(pl.cdiv(B, 4), _CN)
    return min(tn, _MAX_TN)


def _make_kernel(cn, nchunks):
    """Build the 5-layer MLP kernel with a static inner column-chunk loop."""

    def kernel(x_ref,             # (24, TN) bf16 — features (+ ones row) x batch
               w1_ref,            # (64, 24) bf16 — layer-1 bias folded as last column
               w2_ref, b2_ref,    # (128, 64) bf16, (128, 1) bf16
               w3_ref, b3_ref,    # (32, 128) bf16, (32, 1) bf16
               w4_ref, b4_ref,    # (16, 32) bf16, (16, 1) bf16
               w5_ref, b5_ref,    # (1, 16) bf16, (1, 1) f32
               o_ref):            # (1, TN) f32
        def chunk(off):
            xc = x_ref[:, pl.ds(off, cn)]                               # (24, cn) bf16
            # Layer 1: 23(+1) -> 64, ReLU (bias arrives via the ones row of x).
            h = jnp.dot(w1_ref[...], xc, preferred_element_type=jnp.float32)
            h = jnp.maximum(h.astype(jnp.bfloat16), 0)                  # (64, cn) bf16
            # Layer 2: 64 -> 128, ReLU (bias add + ReLU in bf16).
            h = jnp.dot(w2_ref[...], h, preferred_element_type=jnp.float32)
            h = jnp.maximum(h.astype(jnp.bfloat16) + b2_ref[...], 0)    # (128, cn)
            # Layer 3: 128 -> 32, ReLU.
            h = jnp.dot(w3_ref[...], h, preferred_element_type=jnp.float32)
            h = jnp.maximum(h.astype(jnp.bfloat16) + b3_ref[...], 0)    # (32, cn)
            # Layer 4: 32 -> 16, ReLU.
            h = jnp.dot(w4_ref[...], h, preferred_element_type=jnp.float32)
            h = jnp.maximum(h.astype(jnp.bfloat16) + b4_ref[...], 0)    # (16, cn)
            # Output: 16 -> 1, Sigmoid.  Exact reciprocal keeps result in [0, 1];
            # exp(-z) -> inf for very negative z still yields the correct limit 0.
            z = jnp.dot(w5_ref[...], h, preferred_element_type=jnp.float32)
            z = z + b5_ref[...]                                          # (1, cn) f32
            o_ref[:, pl.ds(off, cn)] = 1.0 / (1.0 + jnp.exp(-z))         # lane-dense
            # TODO(synk): layer-5 (1x16) burns a full MXU pass at ~1% utilization;
            # a VPU/XLU sublane-reduce variant needs a bundle dump to justify.

        # Fully-unrolled chunk loop (nchunks <= _MAX_TN//_CN == 8): equivalent to
        # lax.fori_loop(..., unroll=True) but with static, 128-aligned offsets.
        for c in range(nchunks):
            chunk(c * cn)

    return kernel


def taiwanese_credit_classifier(x, params):
    """x: (B, 23) float32; params: PyTorch-layout weights w{i} (out,in), b{i} (out,).

    Returns (B, 1) float32 probabilities (eval mode: Dropout is identity).
    """
    B = x.shape[0]
    tn = _choose_tn(B)
    Bp = _round_up(B, tn)
    cn = min(_CN, tn)
    nchunks = tn // cn

    # Feature-major bf16 input with a folded bias row: (24, Bp), batch on lanes.
    # Single XLA transpose+concat+cast pass; the kernel streams bf16 (half the
    # bytes of f32).  Padded columns are all-zero (including the ones row).
    x_fm = jnp.concatenate(
        [jnp.transpose(x), jnp.ones((1, B), x.dtype)], axis=0).astype(jnp.bfloat16)
    if Bp != B:
        x_fm = jnp.pad(x_fm, ((0, 0), (0, Bp - B)))

    # Kernel-side params (resident in VMEM across grid steps, ~30 KB total).
    w1_aug = jnp.concatenate(
        [params["w1"], params["b1"][:, None]], axis=1).astype(jnp.bfloat16)  # (64, 24)
    kargs = [w1_aug]
    for i in range(2, 5):
        kargs.append(params[f"w{i}"].astype(jnp.bfloat16))
        kargs.append(params[f"b{i}"].astype(jnp.bfloat16)[:, None])
    kargs.append(params["w5"].astype(jnp.bfloat16))                          # (1, 16)
    kargs.append(params["b5"].astype(jnp.float32)[:, None])                  # (1, 1)

    grid = (Bp // tn,)
    in_specs = [pl.BlockSpec((24, tn), lambda i: (0, i))]        # streamed bf16 x tiles
    for a in kargs:
        # Full-shape blocks with constant index maps -> resident in VMEM.
        in_specs.append(pl.BlockSpec(a.shape, lambda i: (0, 0)))
    out_specs = pl.BlockSpec((1, tn), lambda i: (0, i))

    flops_per_sample = 2 * (64 * 24 + sum(o * i for o, i in _DIMS[1:]))
    param_bytes = sum(int(a.size) * a.dtype.itemsize for a in kargs)
    cost = pl.CostEstimate(
        flops=flops_per_sample * Bp,
        transcendentals=Bp,                                      # exp in the sigmoid
        bytes_accessed=24 * Bp * 2 + Bp * 4 + param_bytes,
    )

    out_fm = pl.pallas_call(
        _make_kernel(cn, nchunks),
        out_shape=jax.ShapeDtypeStruct((1, Bp), jnp.float32),
        grid=grid,
        in_specs=in_specs,
        out_specs=out_specs,
        compiler_params=pltpu.CompilerParams(
            dimension_semantics=("parallel",),   # v7x: shard batch tiles over both TCs
        ),
        cost_estimate=cost,
    )(x_fm, *kargs)

    return jnp.transpose(out_fm[:, :B])                          # (B, 1)


def init_params(key):
    """Deterministic init in PyTorch nn.Linear layout: w (out,in), b (out,)."""
    params = {}
    keys = jax.random.split(key, 2 * len(_DIMS))
    for i, (fan_out, fan_in) in enumerate(_DIMS):
        bound = 1.0 / jnp.sqrt(jnp.float32(fan_in))
        params[f"w{i + 1}"] = jax.random.uniform(
            keys[2 * i], (fan_out, fan_in), minval=-bound, maxval=bound,
            dtype=jnp.float32)
        params[f"b{i + 1}"] = jax.random.uniform(
            keys[2 * i + 1], (fan_out,), minval=-bound, maxval=bound,
            dtype=jnp.float32)
    return params


def reference_forward(x, params):
    """Pure-JAX f32 reference matching the PyTorch module (eval mode)."""
    h = x
    for i in range(1, 5):
        h = jnp.maximum(h @ params[f"w{i}"].T + params[f"b{i}"], 0.0)
    z = h @ params["w5"].T + params["b5"]
    return jax.nn.sigmoid(z)


if __name__ == "__main__":
    key = jax.random.PRNGKey(0)
    k_p, k_small, k_big = jax.random.split(key, 3)
    params = init_params(k_p)

    # Small batch (single grid step, single chunk) and a larger batch that
    # exercises the multi-step grid + inner chunk loop.
    for B, k in ((8, k_small), (1500, k_big)):
        x = jax.random.normal(k, (B, 23), dtype=jnp.float32)
        out = jax.block_until_ready(taiwanese_credit_classifier(x, params))
        ref = reference_forward(x, params)
        assert out.shape == (B, 1)
        assert bool(jnp.all(jnp.isfinite(out)))
        assert bool(jnp.all((out >= 0.0) & (out <= 1.0)))
        err = float(jnp.max(jnp.abs(out - ref)))
        # bf16 MXU inputs + bf16 elementwise (f32 accumulate) vs pure-f32 reference.
        assert err < 2e-2, f"B={B}: max abs err {err}"
    print("KERNEL_OK")
</pallas_src>

<mosaic_0001>
module attributes {stable_mosaic.version = 11 : i64} {
  func.func @kernel(%arg0: i32, %arg1: memref<24x128xbf16, #tpu.memory_space<vmem>>, %arg2: memref<64x24xbf16, #tpu.memory_space<vmem>>, %arg3: memref<128x64xbf16, #tpu.memory_space<vmem>>, %arg4: memref<128x1xbf16, #tpu.memory_space<vmem>>, %arg5: memref<32x128xbf16, #tpu.memory_space<vmem>>, %arg6: memref<32x1xbf16, #tpu.memory_space<vmem>>, %arg7: memref<16x32xbf16, #tpu.memory_space<vmem>>, %arg8: memref<16x1xbf16, #tpu.memory_space<vmem>>, %arg9: memref<1x16xbf16, #tpu.memory_space<vmem>>, %arg10: memref<1x1xf32, #tpu.memory_space<vmem>>, %arg11: memref<1x128xf32, #tpu.memory_space<vmem>>) attributes {dimension_semantics = [#tpu.dimension_semantics<parallel>], iteration_bounds = array<i64: 1>, scalar_prefetch = 0 : i64, scratch_operands = 0 : i64, tpu.core_type = #tpu.core_type<tc>, window_params = [{transform_indices = @transform_0, window_bounds = array<i64: 24, 128>}, {pipeline_mode = #tpu.pipeline_mode<synchronous>, transform_indices = @transform_1, window_bounds = array<i64: 64, 24>}, {pipeline_mode = #tpu.pipeline_mode<synchronous>, transform_indices = @transform_2, window_bounds = array<i64: 128, 64>}, {pipeline_mode = #tpu.pipeline_mode<synchronous>, transform_indices = @transform_3, window_bounds = array<i64: 128, 1>}, {pipeline_mode = #tpu.pipeline_mode<synchronous>, transform_indices = @transform_4, window_bounds = array<i64: 32, 128>}, {pipeline_mode = #tpu.pipeline_mode<synchronous>, transform_indices = @transform_5, window_bounds = array<i64: 32, 1>}, {pipeline_mode = #tpu.pipeline_mode<synchronous>, transform_indices = @transform_6, window_bounds = array<i64: 16, 32>}, {pipeline_mode = #tpu.pipeline_mode<synchronous>, transform_indices = @transform_7, window_bounds = array<i64: 16, 1>}, {pipeline_mode = #tpu.pipeline_mode<synchronous>, transform_indices = @transform_8, window_bounds = array<i64: 1, 16>}, {pipeline_mode = #tpu.pipeline_mode<synchronous>, transform_indices = @transform_9, window_bounds = array<i64: 1, 1>}, {transform_indices = @transform_10, window_bounds = array<i64: 1, 128>}]} {
    %c0 = arith.constant 0 : index
    %c0_0 = arith.constant 0 : index
    %0 = vector.load %arg1[%c0, %c0_0] : memref<24x128xbf16, #tpu.memory_space<vmem>>, vector<24x128xbf16>
    %c0_1 = arith.constant 0 : index
    %c0_2 = arith.constant 0 : index
    %1 = vector.load %arg2[%c0_1, %c0_2] : memref<64x24xbf16, #tpu.memory_space<vmem>>, vector<64x24xbf16>
    %cst = arith.constant dense<0.000000e+00> : vector<64x128xf32>
    %2 = tpu.matmul %1, %0, %cst {dimension_numbers = #tpu.dot_dimension_numbers<[1], [0], [0], [1], [0, 0, 1, 1], [], []>} : vector<64x24xbf16>, vector<24x128xbf16>, vector<64x128xf32> -> vector<64x128xf32>
    %3 = arith.truncf %2 : vector<64x128xf32> to vector<64x128xbf16>
    %cst_3 = arith.constant 0.000000e+00 : bf16
    %4 = vector.broadcast %cst_3 : bf16 to vector<64x128xbf16>
    %5 = arith.maximumf %3, %4 : vector<64x128xbf16>
    %c0_4 = arith.constant 0 : index
    %c0_5 = arith.constant 0 : index
    %6 = vector.load %arg3[%c0_4, %c0_5] : memref<128x64xbf16, #tpu.memory_space<vmem>>, vector<128x64xbf16>
    %cst_6 = arith.constant dense<0.000000e+00> : vector<128x128xf32>
    %7 = tpu.matmul %6, %5, %cst_6 {dimension_numbers = #tpu.dot_dimension_numbers<[1], [0], [0], [1], [0, 0, 1, 1], [], []>} : vector<128x64xbf16>, vector<64x128xbf16>, vector<128x128xf32> -> vector<128x128xf32>
    %8 = arith.truncf %7 : vector<128x128xf32> to vector<128x128xbf16>
    %c0_7 = arith.constant 0 : index
    %c0_8 = arith.constant 0 : index
    %9 = vector.load %arg4[%c0_7, %c0_8] : memref<128x1xbf16, #tpu.memory_space<vmem>>, vector<128x1xbf16>
    %10 = vector.broadcast %9 : vector<128x1xbf16> to vector<128x128xbf16>
    %11 = arith.addf %8, %10 : vector<128x128xbf16>
    %cst_9 = arith.constant 0.000000e+00 : bf16
    %12 = vector.broadcast %cst_9 : bf16 to vector<128x128xbf16>
    %13 = arith.maximumf %11, %12 : vector<128x128xbf16>
    %c0_10 = arith.constant 0 : index
    %c0_11 = arith.constant 0 : index
    %14 = vector.load %arg5[%c0_10, %c0_11] : memref<32x128xbf16, #tpu.memory_space<vmem>>, vector<32x128xbf16>
    %cst_12 = arith.constant dense<0.000000e+00> : vector<32x128xf32>
    %15 = tpu.matmul %14, %13, %cst_12 {dimension_numbers = #tpu.dot_dimension_numbers<[1], [0], [0], [1], [0, 0, 1, 1], [], []>} : vector<32x128xbf16>, vector<128x128xbf16>, vector<32x128xf32> -> vector<32x128xf32>
    %16 = arith.truncf %15 : vector<32x128xf32> to vector<32x128xbf16>
    %c0_13 = arith.constant 0 : index
    %c0_14 = arith.constant 0 : index
    %17 = vector.load %arg6[%c0_13, %c0_14] : memref<32x1xbf16, #tpu.memory_space<vmem>>, vector<32x1xbf16>
    %18 = vector.broadcast %17 : vector<32x1xbf16> to vector<32x128xbf16>
    %19 = arith.addf %16, %18 : vector<32x128xbf16>
    %cst_15 = arith.constant 0.000000e+00 : bf16
    %20 = vector.broadcast %cst_15 : bf16 to vector<32x128xbf16>
    %21 = arith.maximumf %19, %20 : vector<32x128xbf16>
    %c0_16 = arith.constant 0 : index
    %c0_17 = arith.constant 0 : index
    %22 = vector.load %arg7[%c0_16, %c0_17] : memref<16x32xbf16, #tpu.memory_space<vmem>>, vector<16x32xbf16>
    %cst_18 = arith.constant dense<0.000000e+00> : vector<16x128xf32>
    %23 = tpu.matmul %22, %21, %cst_18 {dimension_numbers = #tpu.dot_dimension_numbers<[1], [0], [0], [1], [0, 0, 1, 1], [], []>} : vector<16x32xbf16>, vector<32x128xbf16>, vector<16x128xf32> -> vector<16x128xf32>
    %24 = arith.truncf %23 : vector<16x128xf32> to vector<16x128xbf16>
    %c0_19 = arith.constant 0 : index
    %c0_20 = arith.constant 0 : index
    %25 = vector.load %arg8[%c0_19, %c0_20] : memref<16x1xbf16, #tpu.memory_space<vmem>>, vector<16x1xbf16>
    %26 = vector.broadcast %25 : vector<16x1xbf16> to vector<16x128xbf16>
    %27 = arith.addf %24, %26 : vector<16x128xbf16>
    %cst_21 = arith.constant 0.000000e+00 : bf16
    %28 = vector.broadcast %cst_21 : bf16 to vector<16x128xbf16>
    %29 = arith.maximumf %27, %28 : vector<16x128xbf16>
    %c0_22 = arith.constant 0 : index
    %c0_23 = arith.constant 0 : index
    %30 = vector.load %arg9[%c0_22, %c0_23] : memref<1x16xbf16, #tpu.memory_space<vmem>>, vector<1x16xbf16>
    %cst_24 = arith.constant dense<0.000000e+00> : vector<1x128xf32>
    %31 = tpu.matmul %30, %29, %cst_24 {dimension_numbers = #tpu.dot_dimension_numbers<[1], [0], [0], [1], [0, 0, 1, 1], [], []>} : vector<1x16xbf16>, vector<16x128xbf16>, vector<1x128xf32> -> vector<1x128xf32>
    %c0_25 = arith.constant 0 : index
    %c0_26 = arith.constant 0 : index
    %32 = vector.load %arg10[%c0_25, %c0_26] : memref<1x1xf32, #tpu.memory_space<vmem>>, vector<1x1xf32>
    %33 = vector.broadcast %32 : vector<1x1xf32> to vector<1x128xf32>
    %34 = arith.addf %31, %33 : vector<1x128xf32>
    %cst_27 = arith.constant 0.000000e+00 : f32
    %35 = vector.broadcast %cst_27 : f32 to vector<1x128xf32>
    %36 = arith.subf %35, %34 : vector<1x128xf32>
    %37 = math.exp %36 : vector<1x128xf32>
    %cst_28 = arith.constant 1.000000e+00 : f32
    %38 = vector.broadcast %cst_28 : f32 to vector<1x128xf32>
    %39 = arith.addf %38, %37 : vector<1x128xf32>
    %cst_29 = arith.constant 1.000000e+00 : f32
    %40 = vector.broadcast %cst_29 : f32 to vector<1x128xf32>
    %41 = arith.divf %40, %39 : vector<1x128xf32>
    %c0_30 = arith.constant 0 : index
    %c0_31 = arith.constant 0 : index
    %42 = vector.load %arg11[%c0_30, %c0_31] : memref<1x128xf32, #tpu.memory_space<vmem>>, vector<1x128xf32>
    tpu.vector_store %arg11[%c0_30, %c0_31], %41 {strides = array<i32>} : memref<1x128xf32, #tpu.memory_space<vmem>>, vector<1x128xf32>,
    return
  }
  func.func @transform_0(%arg0: i32) -> (i32, i32) {
    %c0_i32 = arith.constant 0 : i32
    %c0_i32_0 = arith.constant 0 : i32
    return %c0_i32, %arg0 : i32, i32
  }
  func.func @transform_1(%arg0: i32) -> (i32, i32) {
    %c0_i32 = arith.constant 0 : i32
    %c0_i32_0 = arith.constant 0 : i32
    %c0_i32_1 = arith.constant 0 : i32
    return %c0_i32, %c0_i32_0 : i32, i32
  }
  func.func @transform_2(%arg0: i32) -> (i32, i32) {
    %c0_i32 = arith.constant 0 : i32
    %c0_i32_0 = arith.constant 0 : i32
    %c0_i32_1 = arith.constant 0 : i32
    return %c0_i32, %c0_i32_0 : i32, i32
  }
  func.func @transform_3(%arg0: i32) -> (i32, i32) {
    %c0_i32 = arith.constant 0 : i32
    %c0_i32_0 = arith.constant 0 : i32
    %c0_i32_1 = arith.constant 0 : i32
    return %c0_i32, %c0_i32_0 : i32, i32
  }
  func.func @transform_4(%arg0: i32) -> (i32, i32) {
    %c0_i32 = arith.constant 0 : i32
    %c0_i32_0 = arith.constant 0 : i32
    %c0_i32_1 = arith.constant 0 : i32
    return %c0_i32, %c0_i32_0 : i32, i32
  }
  func.func @transform_5(%arg0: i32) -> (i32, i32) {
    %c0_i32 = arith.constant 0 : i32
    %c0_i32_0 = arith.constant 0 : i32
    %c0_i32_1 = arith.constant 0 : i32
    return %c0_i32, %c0_i32_0 : i32, i32
  }
  func.func @transform_6(%arg0: i32) -> (i32, i32) {
    %c0_i32 = arith.constant 0 : i32
    %c0_i32_0 = arith.constant 0 : i32
    %c0_i32_1 = arith.constant 0 : i32
    return %c0_i32, %c0_i32_0 : i32, i32
  }
  func.func @transform_7(%arg0: i32) -> (i32, i32) {
    %c0_i32 = arith.constant 0 : i32
    %c0_i32_0 = arith.constant 0 : i32
    %c0_i32_1 = arith.constant 0 : i32
    return %c0_i32, %c0_i32_0 : i32, i32
  }
  func.func @transform_8(%arg0: i32) -> (i32, i32) {
    %c0_i32 = arith.constant 0 : i32
    %c0_i32_0 = arith.constant 0 : i32
    %c0_i32_1 = arith.constant 0 : i32
    return %c0_i32, %c0_i32_0 : i32, i32
  }
  func.func @transform_9(%arg0: i32) -> (i32, i32) {
    %c0_i32 = arith.constant 0 : i32
    %c0_i32_0 = arith.constant 0 : i32
    %c0_i32_1 = arith.constant 0 : i32
    return %c0_i32, %c0_i32_0 : i32, i32
  }
  func.func @transform_10(%arg0: i32) -> (i32, i32) {
    %c0_i32 = arith.constant 0 : i32
    %c0_i32_0 = arith.constant 0 : i32
    return %c0_i32, %arg0 : i32, i32
  }
}

</mosaic_0001>

<llo_original>
// kernel: tpu_custom_call.1
$region0: #{tpu_custom_call.1}
  #allocation0 [shape = 'u32[]', space=smem, size = 0x4, offset = 0x4, fixed_abs, tag = 'smem constant byte address 0x4 - core index']
  #allocation1 [shape = 'u32[144,128]{1,0:T(1,128)}', space=vmem, size = 0x12000, scoped, tag = 'internal scratch']
  #allocation2 [shape = 'f32[1,1]{1,0:T(1,128)S(1)}', space=vmem, size = 0x200, scoped, tag = 'scoped memory for tpu_custom_call.1']
  %s0 = inlined_call_operand.vmem [shape: bf16[24,128], index: 0, kind: input, shape index: {}]
  %s1 = inlined_call_operand.vmem [shape: bf16[64,24], index: 1, kind: input, shape index: {}]
  %s2 = inlined_call_operand.vmem [shape: bf16[128,64], index: 2, kind: input, shape index: {}]
  %s3 = inlined_call_operand.vmem [shape: bf16[128,1], index: 3, kind: input, shape index: {}]
  %s4 = inlined_call_operand.vmem [shape: bf16[32,128], index: 4, kind: input, shape index: {}]
  %s5 = inlined_call_operand.vmem [shape: bf16[32,1], index: 5, kind: input, shape index: {}]
  %s6 = inlined_call_operand.vmem [shape: bf16[16,32], index: 6, kind: input, shape index: {}]
  %s7 = inlined_call_operand.vmem [shape: bf16[16,1], index: 7, kind: input, shape index: {}]
  %s8 = inlined_call_operand.vmem [shape: bf16[1,16], index: 8, kind: input, shape index: {}]
  %s9 = inlined_call_operand.<no memory space> [shape: f32[1,1], index: 9, kind: input, shape index: {}]
  %s10 = inlined_call_operand.hbm [shape: f32[1,128], index: 10, kind: output, shape index: {}]
  %s11 = sld [smem:[#allocation0]]
  $region50: #{tpu_custom_call.1} parent=0
    _
  %s13 = ssub.s32 1, %s11
  %s14 = scalar_select 0, %s13, %s11
  %v15 = vstv %s9
  %16 = vst [vmem:[#allocation2] sm:$0x1] %v15
  $region1: #{tpu_custom_call.1} parent=0
    #allocation3 [shape = 'u8[512]{0}', space=vmem, size = 0x400, scoped, tag = 'output window, operand 0, single buffered']
    #allocation4 [shape = 's32[1]{0}', space=sflag, size = 0x4, scoped, tag = 'scoped memory for tpu_custom_call.1']
    %17 = vsyncpa [#allocation4], 0
    // Predicated region
    $region2: #{tpu_custom_call.1} parent=1 // pred_check
      _
    $region3: #{tpu_custom_call.1} parent=1 // pred_check_branch
      %19 = sbr.rel (0) target = $region5
    $region4: #{tpu_custom_call.1} parent=1 // pred_region
      _
    $region5: #{tpu_custom_call.1} parent=1 // pred_fallthru
      _
    // Predicated region
    $region6: #{tpu_custom_call.1} parent=1 // pred_check
      _
    $region7: #{tpu_custom_call.1} parent=1 // pred_check_branch
      %21 = sbr.rel (0) target = $region9
    $region8: #{tpu_custom_call.1} parent=1 // pred_region
      _
    $region9: #{tpu_custom_call.1} parent=1 // pred_fallthru
      _
    // Predicated region
    $region10: #{tpu_custom_call.1} parent=1 // pred_check
      _
    $region11: #{tpu_custom_call.1} parent=1 // pred_check_branch
      %23 = sbr.rel (0) target = $region13
    $region12: #{tpu_custom_call.1} parent=1 // pred_region
      _
    $region13: #{tpu_custom_call.1} parent=1 // pred_fallthru
      _
    // Predicated region
    $region14: #{tpu_custom_call.1} parent=1 // pred_check
      _
    $region15: #{tpu_custom_call.1} parent=1 // pred_check_branch
      %25 = sbr.rel (0) target = $region17
    $region16: #{tpu_custom_call.1} parent=1 // pred_region
      _
    $region17: #{tpu_custom_call.1} parent=1 // pred_fallthru
      _
    // Predicated region
    $region18: #{tpu_custom_call.1} parent=1 // pred_check
      _
    $region19: #{tpu_custom_call.1} parent=1 // pred_check_branch
      %27 = sbr.rel (0) target = $region21
    $region20: #{tpu_custom_call.1} parent=1 // pred_region
      _
    $region21: #{tpu_custom_call.1} parent=1 // pred_fallthru
      _
    // Predicated region
    $region22: #{tpu_custom_call.1} parent=1 // pred_check
      _
    $region23: #{tpu_custom_call.1} parent=1 // pred_check_branch
      %29 = sbr.rel (0) target = $region25
    $region24: #{tpu_custom_call.1} parent=1 // pred_region
      _
    $region25: #{tpu_custom_call.1} parent=1 // pred_fallthru
      _
    // Predicated region
    $region26: #{tpu_custom_call.1} parent=1 // pred_check
      _
    $region27: #{tpu_custom_call.1} parent=1 // pred_check_branch
      %31 = sbr.rel (0) target = $region29
    $region28: #{tpu_custom_call.1} parent=1 // pred_region
      _
    $region29: #{tpu_custom_call.1} parent=1 // pred_fallthru
      _
    // Predicated region
    $region30: #{tpu_custom_call.1} parent=1 // pred_check
      _
    $region31: #{tpu_custom_call.1} parent=1 // pred_check_branch
      %33 = sbr.rel (0) target = $region33
    $region32: #{tpu_custom_call.1} parent=1 // pred_region
      _
    $region33: #{tpu_custom_call.1} parent=1 // pred_fallthru
      _
    // Predicated region
    $region34: #{tpu_custom_call.1} parent=1 // pred_check
      _
    $region35: #{tpu_custom_call.1} parent=1 // pred_check_branch
      %35 = sbr.rel (0) target = $region37
    $region36: #{tpu_custom_call.1} parent=1 // pred_region
      _
    $region37: #{tpu_custom_call.1} parent=1 // pred_fallthru
      _
    // Predicated region
    $region38: #{tpu_custom_call.1} parent=1 // pred_check
      _
    $region39: #{tpu_custom_call.1} parent=1 // pred_check_branch
      %37 = sbr.rel (0) target = $region41
    $region40: #{tpu_custom_call.1} parent=1 // pred_region
      _
    $region41: #{tpu_custom_call.1} parent=1 // pred_fallthru
      _
    %v39 = vld [vmem:[%s0] sm:$0xf]
    %v40 = vld [vmem:[%s0 + $0x4] sm:$0xf]
    %v41 = vld [vmem:[%s0 + $0x8] sm:$0xf]
    %v42 = vld [vmem:[%s1] sm:$0xf]
    %v43 = vld [vmem:[%s1 + $0x4] sm:$0xf]
    %v44 = vld [vmem:[%s1 + $0x8] sm:$0xf]
    %v45 = vld [vmem:[%s1 + $0xc] sm:$0xf]
    %v46 = vld [vmem:[%s1 + $0x10] sm:$0xf]
    %v47 = vld [vmem:[%s1 + $0x14] sm:$0xf]
    %v48 = vld [vmem:[%s1 + $0x18] sm:$0xf]
    %v49 = vld [vmem:[%s1 + $0x1c] sm:$0xf]
    %v58 = vunpack.c.l.b16 %v42
    %v59 = vunpack.c.l.b16 %v43
    %v60 = vunpack.c.l.b16 %v44
    %v61 = vunpack.c.l.b16 %v45
    %v62 = vunpack.c.l.b16 %v46
    %v63 = vunpack.c.l.b16 %v47
    %v64 = vunpack.c.l.b16 %v48
    %v65 = vunpack.c.l.b16 %v49
    %v66 = vpack.c.b16 %v59, %v58
    %v67 = vpack.c.b16 %v61, %v60
    %v68 = vpack.c.b16 %v63, %v62
    %v69 = vpack.c.b16 %v65, %v64
    %v73 = vunpack.c.l.b16 %v39
    %v74 = vunpack.c.l.b16 %v40
    %v75 = vunpack.c.l.b16 %v41
    %v76 = vpack.c.b16 %v74, %v73
    %v77 = vpack.c.b16 %v75, %v75
    %vm79 = vcmask 195584
    %v81 = vsel %vm79, %v66, 0
    %v84 = vsel %vm79, %v67, 0
    %v87 = vsel %vm79, %v68, 0
    %v90 = vsel %vm79, %v69, 0
    %vm92 = vcmask 1043456
    %v94 = vsel %vm92, %v77, 0
    %96 = vmatprep.subr.bf16.mxu0 0
    %97 = vmatpush1.bf16.msra.mxu0 0
    %98 = vmatprep.subr.bf16.mxu0 0
    %99 = vmatpush1.bf16.msra.mxu0 0
    %100 = vmatprep.subr.bf16.mxu0 0
    %101 = vmatpush1.bf16.msra.mxu0 0
    %102 = vmatprep.subr.bf16.mxu0 0
    %103 = vmatpush1.bf16.msra.mxu0 0
    %104 = vmatprep.subr.bf16.mxu0 0
    %105 = vmatpush1.bf16.msra.mxu0 0
    %106 = vmatprep.subr.bf16.mxu0 0
    %107 = vmatpush1.bf16.msra.mxu0 0
    %108 = vmatprep.subr.bf16.mxu0 0
    %109 = vmatpush1.bf16.msra.mxu0 %v94
    %110 = vmatprep.subr.bf16.mxu0 0
    %111 = vmatpush1.bf16.msra.mxu0 %v76
    %112 = vmatprep.subr.bf16.mxu0 0
    %113 = vmatpush2.bf16.msra.mxu0 0
    %114 = vmatprep.subr.bf16.mxu0 0
    %115 = vmatpush2.bf16.msra.mxu0 0
    %116 = vmatprep.subr.bf16.mxu0 0
    %117 = vmatpush2.bf16.msra.mxu0 0
    %118 = vmatprep.subr.bf16.mxu0 0
    %119 = vmatpush2.bf16.msra.mxu0 0
    %120 = vmatprep.subr.bf16.mxu0 0
    %121 = vmatpush2.bf16.msra.mxu0 0
    %122 = vmatprep.subr.bf16.mxu0 0
    %123 = vmatpush2.bf16.msra.mxu0 0
    %124 = vmatprep.subr.bf16.mxu0 0
    %125 = vmatpush2.bf16.msra.mxu0 0
    %126 = vmatprep.subr.bf16.mxu0 0
    %127 = vmatpush2.bf16.msra.mxu0 0
    %128 = vmatprep.mubr.bf16.mxu0 0
    %129 = vmatmul.mubr.bf16.gmra.mxu0 %v81
    %v130 = vpop.f32.mrf.mxu0
    %v131 = vadd.f32 0.0, %v130
    %v132 = vpop.f32.mrf.mxu0
    %v133 = vpop.f32.mrf.mxu0
    %v134 = vadd.f32 0.0, %v133
    %v135 = vpop.f32.mrf.mxu0
    %136 = vmatprep.mubr.bf16.mxu0 0
    %137 = vmatmul.mubr.bf16.gmra.mxu0 %v84
    %v138 = vpop.f32.mrf.mxu0
    %v139 = vadd.f32 0.0, %v138
    %v140 = vpop.f32.mrf.mxu0
    %v141 = vpop.f32.mrf.mxu0
    %v142 = vadd.f32 0.0, %v141
    %v143 = vpop.f32.mrf.mxu0
    %144 = vmatprep.mubr.bf16.mxu0 0
    %145 = vmatmul.mubr.bf16.gmra.mxu0 %v87
    %v146 = vpop.f32.mrf.mxu0
    %v147 = vadd.f32 0.0, %v146
    %v148 = vpop.f32.mrf.mxu0
    %v149 = vpop.f32.mrf.mxu0
    %v150 = vadd.f32 0.0, %v149
    %v151 = vpop.f32.mrf.mxu0
    %152 = vmatprep.mubr.bf16.mxu0 0
    %153 = vmatmul.mubr.bf16.gmra.mxu0 %v90
    %v154 = vpop.f32.mrf.mxu0
    %v155 = vadd.f32 0.0, %v154
    %v156 = vpop.f32.mrf.mxu0
    %v157 = vpop.f32.mrf.mxu0
    %v158 = vadd.f32 0.0, %v157
    %v159 = vpop.f32.mrf.mxu0
    %160 = vdwg.mxu0
    %v161 = vpack.c.bf16 %v134, %v131
    %v162 = vpack.c.bf16 %v142, %v139
    %v163 = vpack.c.bf16 %v150, %v147
    %v164 = vpack.c.bf16 %v158, %v155
    %v165 = vmax.bf16 %v161, 0
    %v166 = vmax.bf16 %v162, 0
    %v167 = vmax.bf16 %v163, 0
    %v168 = vmax.bf16 %v164, 0
    %v169 = vld [vmem:[%s2] sm:$0xf]
    %v170 = vld [vmem:[%s2 + $0x4] sm:$0xf]
    %v171 = vld [vmem:[%s2 + $0x8] sm:$0xf]
    %v172 = vld [vmem:[%s2 + $0xc] sm:$0xf]
    %v173 = vld [vmem:[%s2 + $0x10] sm:$0xf]
    %v174 = vld [vmem:[%s2 + $0x14] sm:$0xf]
    %v175 = vld [vmem:[%s2 + $0x18] sm:$0xf]
    %v176 = vld [vmem:[%s2 + $0x1c] sm:$0xf]
    %v177 = vld [vmem:[%s2 + $0x20] sm:$0xf]
    %v178 = vld [vmem:[%s2 + $0x24] sm:$0xf]
    %v179 = vld [vmem:[%s2 + $0x28] sm:$0xf]
    %v180 = vld [vmem:[%s2 + $0x2c] sm:$0xf]
    %v181 = vld [vmem:[%s2 + $0x30] sm:$0xf]
    %v182 = vld [vmem:[%s2 + $0x34] sm:$0xf]
    %v183 = vld [vmem:[%s2 + $0x38] sm:$0xf]
    %v184 = vld [vmem:[%s2 + $0x3c] sm:$0xf]
    %v201 = vunpack.c.l.b16 %v169
    %v202 = vunpack.c.l.b16 %v170
    %v203 = vunpack.c.l.b16 %v171
    %v204 = vunpack.c.l.b16 %v172
    %v205 = vunpack.c.l.b16 %v173
    %v206 = vunpack.c.l.b16 %v174
    %v207 = vunpack.c.l.b16 %v175
    %v208 = vunpack.c.l.b16 %v176
    %v209 = vunpack.c.l.b16 %v177
    %v210 = vunpack.c.l.b16 %v178
    %v211 = vunpack.c.l.b16 %v179
    %v212 = vunpack.c.l.b16 %v180
    %v213 = vunpack.c.l.b16 %v181
    %v214 = vunpack.c.l.b16 %v182
    %v215 = vunpack.c.l.b16 %v183
    %v216 = vunpack.c.l.b16 %v184
    %v217 = vpack.c.b16 %v202, %v201
    %v218 = vpack.c.b16 %v204, %v203
    %v219 = vpack.c.b16 %v206, %v205
    %v220 = vpack.c.b16 %v208, %v207
    %v221 = vpack.c.b16 %v210, %v209
    %v222 = vpack.c.b16 %v212, %v211
    %v223 = vpack.c.b16 %v214, %v213
    %v224 = vpack.c.b16 %v216, %v215
    %vm225 = vcmask 523264
    %v227 = vsel %vm225, %v217, 0
    %v230 = vsel %vm225, %v218, 0
    %v233 = vsel %vm225, %v219, 0
    %v236 = vsel %vm225, %v220, 0
    %v239 = vsel %vm225, %v221, 0
    %v242 = vsel %vm225, %v222, 0
    %v245 = vsel %vm225, %v223, 0
    %v248 = vsel %vm225, %v224, 0
    %250 = vmatprep.subr.bf16.mxu0 0
    %251 = vmatpush1.bf16.msra.mxu0 0
    %252 = vmatprep.subr.bf16.mxu0 0
    %253 = vmatpush1.bf16.msra.mxu0 0
    %254 = vmatprep.subr.bf16.mxu0 0
    %255 = vmatpush1.bf16.msra.mxu0 0
    %256 = vmatprep.subr.bf16.mxu0 0
    %257 = vmatpush1.bf16.msra.mxu0 0
    %258 = vmatprep.subr.bf16.mxu0 0
    %259 = vmatpush1.bf16.msra.mxu0 %v168
    %260 = vmatprep.subr.bf16.mxu0 0
    %261 = vmatpush1.bf16.msra.mxu0 %v167
    %262 = vmatprep.subr.bf16.mxu0 0
    %263 = vmatpush1.bf16.msra.mxu0 %v166
    %264 = vmatprep.subr.bf16.mxu0 0
    %265 = vmatpush1.bf16.msra.mxu0 %v165
    %266 = vmatprep.subr.bf16.mxu0 0
    %267 = vmatpush2.bf16.msra.mxu0 0
    %268 = vmatprep.subr.bf16.mxu0 0
    %269 = vmatpush2.bf16.msra.mxu0 0
    %270 = vmatprep.subr.bf16.mxu0 0
    %271 = vmatpush2.bf16.msra.mxu0 0
    %272 = vmatprep.subr.bf16.mxu0 0
    %273 = vmatpush2.bf16.msra.mxu0 0
    %274 = vmatprep.subr.bf16.mxu0 0
    %275 = vmatpush2.bf16.msra.mxu0 0
    %276 = vmatprep.subr.bf16.mxu0 0
    %277 = vmatpush2.bf16.msra.mxu0 0
    %278 = vmatprep.subr.bf16.mxu0 0
    %279 = vmatpush2.bf16.msra.mxu0 0
    %280 = vmatprep.subr.bf16.mxu0 0
    %281 = vmatpush2.bf16.msra.mxu0 0
    %282 = vmatprep.mubr.bf16.mxu0 0
    %283 = vmatmul.mubr.bf16.gmra.mxu0 %v227
    %v284 = vpop.f32.mrf.mxu0
    %v285 = vadd.f32 0.0, %v284
    %v286 = vpop.f32.mrf.mxu0
    %v287 = vpop.f32.mrf.mxu0
    %v288 = vadd.f32 0.0, %v287
    %v289 = vpop.f32.mrf.mxu0
    %290 = vmatprep.mubr.bf16.mxu0 0
    %291 = vmatmul.mubr.bf16.gmra.mxu0 %v230
    %v292 = vpop.f32.mrf.mxu0
    %v293 = vadd.f32 0.0, %v292
    %v294 = vpop.f32.mrf.mxu0
    %v295 = vpop.f32.mrf.mxu0
    %v296 = vadd.f32 0.0, %v295
    %v297 = vpop.f32.mrf.mxu0
    %298 = vmatprep.mubr.bf16.mxu0 0
    %299 = vmatmul.mubr.bf16.gmra.mxu0 %v233
    %v300 = vpop.f32.mrf.mxu0
    %v301 = vadd.f32 0.0, %v300
    %v302 = vpop.f32.mrf.mxu0
    %v303 = vpop.f32.mrf.mxu0
    %v304 = vadd.f32 0.0, %v303
    %v305 = vpop.f32.mrf.mxu0
    %306 = vmatprep.mubr.bf16.mxu0 0
    %307 = vmatmul.mubr.bf16.gmra.mxu0 %v236
    %v308 = vpop.f32.mrf.mxu0
    %v309 = vadd.f32 0.0, %v308
    %v310 = vpop.f32.mrf.mxu0
    %v311 = vpop.f32.mrf.mxu0
    %v312 = vadd.f32 0.0, %v311
    %v313 = vpop.f32.mrf.mxu0
    %314 = vmatprep.mubr.bf16.mxu0 0
    %315 = vmatmul.mubr.bf16.gmra.mxu0 %v239
    %v316 = vpop.f32.mrf.mxu0
    %v317 = vadd.f32 0.0, %v316
    %v318 = vpop.f32.mrf.mxu0
    %v319 = vpop.f32.mrf.mxu0
    %v320 = vadd.f32 0.0, %v319
    %v321 = vpop.f32.mrf.mxu0
    %322 = vmatprep.mubr.bf16.mxu0 0
    %323 = vmatmul.mubr.bf16.gmra.mxu0 %v242
    %v324 = vpop.f32.mrf.mxu0
    %v325 = vadd.f32 0.0, %v324
    %v326 = vpop.f32.mrf.mxu0
    %v327 = vpop.f32.mrf.mxu0
    %v328 = vadd.f32 0.0, %v327
    %v329 = vpop.f32.mrf.mxu0
    %330 = vmatprep.mubr.bf16.mxu0 0
    %331 = vmatmul.mubr.bf16.gmra.mxu0 %v245
    %v332 = vpop.f32.mrf.mxu0
    %v333 = vadd.f32 0.0, %v332
    %v334 = vpop.f32.mrf.mxu0
    %v335 = vpop.f32.mrf.mxu0
    %v336 = vadd.f32 0.0, %v335
    %v337 = vpop.f32.mrf.mxu0
    %338 = vmatprep.mubr.bf16.mxu0 0
    %339 = vmatmul.mubr.bf16.gmra.mxu0 %v248
    %v340 = vpop.f32.mrf.mxu0
    %v341 = vadd.f32 0.0, %v340
    %v342 = vpop.f32.mrf.mxu0
    %v343 = vpop.f32.mrf.mxu0
    %v344 = vadd.f32 0.0, %v343
    %v345 = vpop.f32.mrf.mxu0
    %346 = vdwg.mxu0
    %v347 = vpack.c.bf16 %v288, %v285
    %v348 = vpack.c.bf16 %v296, %v293
    %v349 = vpack.c.bf16 %v304, %v301
    %v350 = vpack.c.bf16 %v312, %v309
    %v351 = vpack.c.bf16 %v320, %v317
    %v352 = vpack.c.bf16 %v328, %v325
    %v353 = vpack.c.bf16 %v336, %v333
    %v354 = vpack.c.bf16 %v344, %v341
    %v355 = vld [vmem:[%s3] sm:$0xf]
    %v356 = vld [vmem:[%s3 + $0x4] sm:$0xf]
    %v357 = vld [vmem:[%s3 + $0x8] sm:$0xf]
    %v358 = vld [vmem:[%s3 + $0xc] sm:$0xf]
    %v359 = vld [vmem:[%s3 + $0x10] sm:$0xf]
    %v360 = vld [vmem:[%s3 + $0x14] sm:$0xf]
    %v361 = vld [vmem:[%s3 + $0x18] sm:$0xf]
    %v362 = vld [vmem:[%s3 + $0x1c] sm:$0xf]
    %v363 = vld [vmem:[%s3 + $0x20] sm:$0xf]
    %v364 = vld [vmem:[%s3 + $0x24] sm:$0xf]
    %v365 = vld [vmem:[%s3 + $0x28] sm:$0xf]
    %v366 = vld [vmem:[%s3 + $0x2c] sm:$0xf]
    %v367 = vld [vmem:[%s3 + $0x30] sm:$0xf]
    %v368 = vld [vmem:[%s3 + $0x34] sm:$0xf]
    %v369 = vld [vmem:[%s3 + $0x38] sm:$0xf]
    %v370 = vld [vmem:[%s3 + $0x3c] sm:$0xf]
    %372 = vset.pattern.permute.xlu0 0
    %373 = vperm.xlu0 %372, %v355
    %v374 = vpop.permute.xlu0 %373
    %v377 = vunpack.c.l.s4 839922192
    %v378 = vunpack.c.0.s8 %v377
    %v379 = vlaneseq
    %v380 = vshrl.u32 %v379, 7
    %v381 = vsub.s32 %v378, %v380
    %v382 = vrot.slane %v374, %v381
    %384 = vset.pattern.permute.xlu0 0
    %385 = vperm.xlu0 %384, %v356
    %v386 = vpop.permute.xlu0 %385
    %v389 = vunpack.c.l.s4 839922192
    %v390 = vunpack.c.0.s8 %v389
    %v391 = vlaneseq
    %v392 = vshrl.u32 %v391, 7
    %v393 = vsub.s32 %v390, %v392
    %v394 = vrot.slane %v386, %v393
    %396 = vset.pattern.permute.xlu0 0
    %397 = vperm.xlu0 %396, %v357
    %v398 = vpop.permute.xlu0 %397
    %v401 = vunpack.c.l.s4 839922192
    %v402 = vunpack.c.0.s8 %v401
    %v403 = vlaneseq
    %v404 = vshrl.u32 %v403, 7
    %v405 = vsub.s32 %v402, %v404
    %v406 = vrot.slane %v398, %v405
    %408 = vset.pattern.permute.xlu0 0
    %409 = vperm.xlu0 %408, %v358
    %v410 = vpop.permute.xlu0 %409
    %v413 = vunpack.c.l.s4 839922192
    %v414 = vunpack.c.0.s8 %v413
    %v415 = vlaneseq
    %v416 = vshrl.u32 %v415, 7
    %v417 = vsub.s32 %v414, %v416
    %v418 = vrot.slane %v410, %v417
    %420 = vset.pattern.permute.xlu0 0
    %421 = vperm.xlu0 %420, %v359
    %v422 = vpop.permute.xlu0 %421
    %v425 = vunpack.c.l.s4 839922192
    %v426 = vunpack.c.0.s8 %v425
    %v427 = vlaneseq
    %v428 = vshrl.u32 %v427, 7
    %v429 = vsub.s32 %v426, %v428
    %v430 = vrot.slane %v422, %v429
    %432 = vset.pattern.permute.xlu0 0
    %433 = vperm.xlu0 %432, %v360
    %v434 = vpop.permute.xlu0 %433
    %v437 = vunpack.c.l.s4 839922192
    %v438 = vunpack.c.0.s8 %v437
    %v439 = vlaneseq
    %v440 = vshrl.u32 %v439, 7
    %v441 = vsub.s32 %v438, %v440
    %v442 = vrot.slane %v434, %v441
    %444 = vset.pattern.permute.xlu0 0
    %445 = vperm.xlu0 %444, %v361
    %v446 = vpop.permute.xlu0 %445
    %v449 = vunpack.c.l.s4 839922192
    %v450 = vunpack.c.0.s8 %v449
    %v451 = vlaneseq
    %v452 = vshrl.u32 %v451, 7
    %v453 = vsub.s32 %v450, %v452
    %v454 = vrot.slane %v446, %v453
    %456 = vset.pattern.permute.xlu0 0
    %457 = vperm.xlu0 %456, %v362
    %v458 = vpop.permute.xlu0 %457
    %v461 = vunpack.c.l.s4 839922192
    %v462 = vunpack.c.0.s8 %v461
    %v463 = vlaneseq
    %v464 = vshrl.u32 %v463, 7
    %v465 = vsub.s32 %v462, %v464
    %v466 = vrot.slane %v458, %v465
    %468 = vset.pattern.permute.xlu0 0
    %469 = vperm.xlu0 %468, %v363
    %v470 = vpop.permute.xlu0 %469
    %v473 = vunpack.c.l.s4 839922192
    %v474 = vunpack.c.0.s8 %v473
    %v475 = vlaneseq
    %v476 = vshrl.u32 %v475, 7
    %v477 = vsub.s32 %v474, %v476
    %v478 = vrot.slane %v470, %v477
    %480 = vset.pattern.permute.xlu0 0
    %481 = vperm.xlu0 %480, %v364
    %v482 = vpop.permute.xlu0 %481
    %v485 = vunpack.c.l.s4 839922192
    %v486 = vunpack.c.0.s8 %v485
    %v487 = vlaneseq
    %v488 = vshrl.u32 %v487, 7
    %v489 = vsub.s32 %v486, %v488
    %v490 = vrot.slane %v482, %v489
    %492 = vset.pattern.permute.xlu0 0
    %493 = vperm.xlu0 %492, %v365
    %v494 = vpop.permute.xlu0 %493
    %v497 = vunpack.c.l.s4 839922192
    %v498 = vunpack.c.0.s8 %v497
    %v499 = vlaneseq
    %v500 = vshrl.u32 %v499, 7
    %v501 = vsub.s32 %v498, %v500
    %v502 = vrot.slane %v494, %v501
    %504 = vset.pattern.permute.xlu0 0
    %505 = vperm.xlu0 %504, %v366
    %v506 = vpop.permute.xlu0 %505
    %v509 = vunpack.c.l.s4 839922192
    %v510 = vunpack.c.0.s8 %v509
    %v511 = vlaneseq
    %v512 = vshrl.u32 %v511, 7
    %v513 = vsub.s32 %v510, %v512
    %v514 = vrot.slane %v506, %v513
    %516 = vset.pattern.permute.xlu0 0
    %517 = vperm.xlu0 %516, %v367
    %v518 = vpop.permute.xlu0 %517
    %v521 = vunpack.c.l.s4 839922192
    %v522 = vunpack.c.0.s8 %v521
    %v523 = vlaneseq
    %v524 = vshrl.u32 %v523, 7
    %v525 = vsub.s32 %v522, %v524
    %v526 = vrot.slane %v518, %v525
    %528 = vset.pattern.permute.xlu0 0
    %529 = vperm.xlu0 %528, %v368
    %v530 = vpop.permute.xlu0 %529
    %v533 = vunpack.c.l.s4 839922192
    %v534 = vunpack.c.0.s8 %v533
    %v535 = vlaneseq
    %v536 = vshrl.u32 %v535, 7
    %v537 = vsub.s32 %v534, %v536
    %v538 = vrot.slane %v530, %v537
    %540 = vset.pattern.permute.xlu0 0
    %541 = vperm.xlu0 %540, %v369
    %v542 = vpop.permute.xlu0 %541
    %v545 = vunpack.c.l.s4 839922192
    %v546 = vunpack.c.0.s8 %v545
    %v547 = vlaneseq
    %v548 = vshrl.u32 %v547, 7
    %v549 = vsub.s32 %v546, %v548
    %v550 = vrot.slane %v542, %v549
    %552 = vset.pattern.permute.xlu0 0
    %553 = vperm.xlu0 %552, %v370
    %v554 = vpop.permute.xlu0 %553
    %v557 = vunpack.c.l.s4 839922192
    %v558 = vunpack.c.0.s8 %v557
    %v559 = vlaneseq
    %v560 = vshrl.u32 %v559, 7
    %v561 = vsub.s32 %v558, %v560
    %v562 = vrot.slane %v554, %v561
    %v579 = vunpack.c.l.b16 %v382
    %v580 = vunpack.c.l.b16 %v394
    %v581 = vunpack.c.l.b16 %v406
    %v582 = vunpack.c.l.b16 %v418
    %v583 = vunpack.c.l.b16 %v430
    %v584 = vunpack.c.l.b16 %v442
    %v585 = vunpack.c.l.b16 %v454
    %v586 = vunpack.c.l.b16 %v466
    %v587 = vunpack.c.l.b16 %v478
    %v588 = vunpack.c.l.b16 %v490
    %v589 = vunpack.c.l.b16 %v502
    %v590 = vunpack.c.l.b16 %v514
    %v591 = vunpack.c.l.b16 %v526
    %v592 = vunpack.c.l.b16 %v538
    %v593 = vunpack.c.l.b16 %v550
    %v594 = vunpack.c.l.b16 %v562
    %v595 = vpack.c.b16 %v580, %v579
    %v596 = vpack.c.b16 %v582, %v581
    %v597 = vpack.c.b16 %v584, %v583
    %v598 = vpack.c.b16 %v586, %v585
    %v599 = vpack.c.b16 %v588, %v587
    %v600 = vpack.c.b16 %v590, %v589
    %v601 = vpack.c.b16 %v592, %v591
    %v602 = vpack.c.b16 %v594, %v593
    %v611 = vadd.bf16 %v347, %v595
    %v612 = vadd.bf16 %v348, %v596
    %v613 = vadd.bf16 %v349, %v597
    %v614 = vadd.bf16 %v350, %v598
    %v615 = vadd.bf16 %v351, %v599
    %v616 = vadd.bf16 %v352, %v600
    %v617 = vadd.bf16 %v353, %v601
    %v618 = vadd.bf16 %v354, %v602
    %v619 = vmax.bf16 %v611, 0
    %v620 = vmax.bf16 %v612, 0
    %v621 = vmax.bf16 %v613, 0
    %v622 = vmax.bf16 %v614, 0
    %v623 = vmax.bf16 %v615, 0
    %v624 = vmax.bf16 %v616, 0
    %v625 = vmax.bf16 %v617, 0
    %v626 = vmax.bf16 %v618, 0
    %v627 = vld [vmem:[%s4] sm:$0xf]
    %v628 = vld [vmem:[%s4 + $0x4] sm:$0xf]
    %v629 = vld [vmem:[%s4 + $0x8] sm:$0xf]
    %v630 = vld [vmem:[%s4 + $0xc] sm:$0xf]
    %v635 = vunpack.c.l.b16 %v627
    %v636 = vunpack.c.l.b16 %v628
    %v637 = vunpack.c.l.b16 %v629
    %v638 = vunpack.c.l.b16 %v630
    %v639 = vpack.c.b16 %v636, %v635
    %v640 = vpack.c.b16 %v638, %v637
    %643 = vmatprep.subr.bf16.mxu0 0
    %644 = vmatpush1.bf16.msra.mxu0 %v626
    %645 = vmatprep.subr.bf16.mxu0 0
    %646 = vmatpush1.bf16.msra.mxu0 %v625
    %647 = vmatprep.subr.bf16.mxu0 0
    %648 = vmatpush1.bf16.msra.mxu0 %v624
    %649 = vmatprep.subr.bf16.mxu0 0
    %650 = vmatpush1.bf16.msra.mxu0 %v623
    %651 = vmatprep.subr.bf16.mxu0 0
    %652 = vmatpush1.bf16.msra.mxu0 %v622
    %653 = vmatprep.subr.bf16.mxu0 0
    %654 = vmatpush1.bf16.msra.mxu0 %v621
    %655 = vmatprep.subr.bf16.mxu0 0
    %656 = vmatpush1.bf16.msra.mxu0 %v620
    %657 = vmatprep.subr.bf16.mxu0 0
    %658 = vmatpush1.bf16.msra.mxu0 %v619
    %659 = vmatprep.subr.bf16.mxu0 0
    %660 = vmatpush2.bf16.msra.mxu0 0
    %661 = vmatprep.subr.bf16.mxu0 0
    %662 = vmatpush2.bf16.msra.mxu0 0
    %663 = vmatprep.subr.bf16.mxu0 0
    %664 = vmatpush2.bf16.msra.mxu0 0
    %665 = vmatprep.subr.bf16.mxu0 0
    %666 = vmatpush2.bf16.msra.mxu0 0
    %667 = vmatprep.subr.bf16.mxu0 0
    %668 = vmatpush2.bf16.msra.mxu0 0
    %669 = vmatprep.subr.bf16.mxu0 0
    %670 = vmatpush2.bf16.msra.mxu0 0
    %671 = vmatprep.subr.bf16.mxu0 0
    %672 = vmatpush2.bf16.msra.mxu0 0
    %673 = vmatprep.subr.bf16.mxu0 0
    %674 = vmatpush2.bf16.msra.mxu0 0
    %675 = vmatprep.mubr.bf16.mxu0 0
    %676 = vmatmul.mubr.bf16.gmra.mxu0 %v639
    %v677 = vpop.f32.mrf.mxu0
    %v678 = vadd.f32 0.0, %v677
    %v679 = vpop.f32.mrf.mxu0
    %v680 = vpop.f32.mrf.mxu0
    %v681 = vadd.f32 0.0, %v680
    %v682 = vpop.f32.mrf.mxu0
    %683 = vmatprep.mubr.bf16.mxu0 0
    %684 = vmatmul.mubr.bf16.gmra.mxu0 %v640
    %v685 = vpop.f32.mrf.mxu0
    %v686 = vadd.f32 0.0, %v685
    %v687 = vpop.f32.mrf.mxu0
    %v688 = vpop.f32.mrf.mxu0
    %v689 = vadd.f32 0.0, %v688
    %v690 = vpop.f32.mrf.mxu0
    %691 = vdwg.mxu0
    %v692 = vpack.c.bf16 %v681, %v678
    %v693 = vpack.c.bf16 %v689, %v686
    %v694 = vld [vmem:[%s5] sm:$0xf]
    %v695 = vld [vmem:[%s5 + $0x4] sm:$0xf]
    %v696 = vld [vmem:[%s5 + $0x8] sm:$0xf]
    %v697 = vld [vmem:[%s5 + $0xc] sm:$0xf]
    %699 = vset.pattern.permute.xlu0 0
    %700 = vperm.xlu0 %699, %v694
    %v701 = vpop.permute.xlu0 %700
    %v704 = vunpack.c.l.s4 839922192
    %v705 = vunpack.c.0.s8 %v704
    %v706 = vlaneseq
    %v707 = vshrl.u32 %v706, 7
    %v708 = vsub.s32 %v705, %v707
    %v709 = vrot.slane %v701, %v708
    %711 = vset.pattern.permute.xlu0 0
    %712 = vperm.xlu0 %711, %v695
    %v713 = vpop.permute.xlu0 %712
    %v716 = vunpack.c.l.s4 839922192
    %v717 = vunpack.c.0.s8 %v716
    %v718 = vlaneseq
    %v719 = vshrl.u32 %v718, 7
    %v720 = vsub.s32 %v717, %v719
    %v721 = vrot.slane %v713, %v720
    %723 = vset.pattern.permute.xlu0 0
    %724 = vperm.xlu0 %723, %v696
    %v725 = vpop.permute.xlu0 %724
    %v728 = vunpack.c.l.s4 839922192
    %v729 = vunpack.c.0.s8 %v728
    %v730 = vlaneseq
    %v731 = vshrl.u32 %v730, 7
    %v732 = vsub.s32 %v729, %v731
    %v733 = vrot.slane %v725, %v732
    %735 = vset.pattern.permute.xlu0 0
    %736 = vperm.xlu0 %735, %v697
    %v737 = vpop.permute.xlu0 %736
    %v740 = vunpack.c.l.s4 839922192
    %v741 = vunpack.c.0.s8 %v740
    %v742 = vlaneseq
    %v743 = vshrl.u32 %v742, 7
    %v744 = vsub.s32 %v741, %v743
    %v745 = vrot.slane %v737, %v744
    %v750 = vunpack.c.l.b16 %v709
    %v751 = vunpack.c.l.b16 %v721
    %v752 = vunpack.c.l.b16 %v733
    %v753 = vunpack.c.l.b16 %v745
    %v754 = vpack.c.b16 %v751, %v750
    %v755 = vpack.c.b16 %v753, %v752
    %v758 = vadd.bf16 %v692, %v754
    %v759 = vadd.bf16 %v693, %v755
    %v760 = vmax.bf16 %v758, 0
    %v761 = vmax.bf16 %v759, 0
    %v762 = vld [vmem:[%s6] sm:$0xf]
    %v763 = vld [vmem:[%s6 + $0x4] sm:$0xf]
    %v766 = vunpack.c.l.b16 %v762
    %v767 = vunpack.c.l.b16 %v763
    %v768 = vpack.c.b16 %v767, %v766
    %vm769 = vcmask 261120
    %v771 = vsel %vm769, %v768, 0
    %773 = vmatprep.subr.bf16.mxu0 0
    %774 = vmatpush1.bf16.msra.mxu0 0
    %775 = vmatprep.subr.bf16.mxu0 0
    %776 = vmatpush1.bf16.msra.mxu0 0
    %777 = vmatprep.subr.bf16.mxu0 0
    %778 = vmatpush1.bf16.msra.mxu0 0
    %779 = vmatprep.subr.bf16.mxu0 0
    %780 = vmatpush1.bf16.msra.mxu0 0
    %781 = vmatprep.subr.bf16.mxu0 0
    %782 = vmatpush1.bf16.msra.mxu0 0
    %783 = vmatprep.subr.bf16.mxu0 0
    %784 = vmatpush1.bf16.msra.mxu0 0
    %785 = vmatprep.subr.bf16.mxu0 0
    %786 = vmatpush1.bf16.msra.mxu0 %v761
    %787 = vmatprep.subr.bf16.mxu0 0
    %788 = vmatpush1.bf16.msra.mxu0 %v760
    %789 = vmatprep.subr.bf16.mxu0 0
    %790 = vmatpush2.bf16.msra.mxu0 0
    %791 = vmatprep.subr.bf16.mxu0 0
    %792 = vmatpush2.bf16.msra.mxu0 0
    %793 = vmatprep.subr.bf16.mxu0 0
    %794 = vmatpush2.bf16.msra.mxu0 0
    %795 = vmatprep.subr.bf16.mxu0 0
    %796 = vmatpush2.bf16.msra.mxu0 0
    %797 = vmatprep.subr.bf16.mxu0 0
    %798 = vmatpush2.bf16.msra.mxu0 0
    %799 = vmatprep.subr.bf16.mxu0 0
    %800 = vmatpush2.bf16.msra.mxu0 0
    %801 = vmatprep.subr.bf16.mxu0 0
    %802 = vmatpush2.bf16.msra.mxu0 0
    %803 = vmatprep.subr.bf16.mxu0 0
    %804 = vmatpush2.bf16.msra.mxu0 0
    %805 = vmatprep.mubr.bf16.mxu0 0
    %806 = vmatmul.mubr.bf16.gmra.mxu0 %v771
    %v807 = vpop.f32.mrf.mxu0
    %v808 = vadd.f32 0.0, %v807
    %v809 = vpop.f32.mrf.mxu0
    %v810 = vpop.f32.mrf.mxu0
    %v811 = vadd.f32 0.0, %v810
    %v812 = vpop.f32.mrf.mxu0
    %813 = vdwg.mxu0
    %v814 = vpack.c.bf16 %v811, %v808
    %v815 = vld [vmem:[%s7] sm:$0xf]
    %v816 = vld [vmem:[%s7 + $0x4] sm:$0xf]
    %818 = vset.pattern.permute.xlu0 0
    %819 = vperm.xlu0 %818, %v815
    %v820 = vpop.permute.xlu0 %819
    %v823 = vunpack.c.l.s4 839922192
    %v824 = vunpack.c.0.s8 %v823
    %v825 = vlaneseq
    %v826 = vshrl.u32 %v825, 7
    %v827 = vsub.s32 %v824, %v826
    %v828 = vrot.slane %v820, %v827
    %830 = vset.pattern.permute.xlu0 0
    %831 = vperm.xlu0 %830, %v816
    %v832 = vpop.permute.xlu0 %831
    %v835 = vunpack.c.l.s4 839922192
    %v836 = vunpack.c.0.s8 %v835
    %v837 = vlaneseq
    %v838 = vshrl.u32 %v837, 7
    %v839 = vsub.s32 %v836, %v838
    %v840 = vrot.slane %v832, %v839
    %v843 = vunpack.c.l.b16 %v828
    %v844 = vunpack.c.l.b16 %v840
    %v845 = vpack.c.b16 %v844, %v843
    %v847 = vadd.bf16 %v814, %v845
    %v848 = vmax.bf16 %v847, 0
    %v849 = vld [vmem:[%s8] sm:$0x1]
    %v850 = vld [vmem:[#allocation2] sm:$0x1]
    %852 = vset.pattern.permute.xlu0 0
    %853 = vperm.xlu0 %852, %v850
    %v854 = vpop.permute.xlu0 %853
    %v856 = vlaneseq
    %v857 = vshrl.u32 %v856, 7
    %v858 = vsub.s32 0, %v857
    %v859 = vrot.slane %v854, %v858
    %vm860 = vcmask 130048
    %v862 = vsel %vm860, %v849, 0
    %864 = vmatprep.subr.bf16.mxu0 0
    %865 = vmatpush1.bf16.msra.mxu0 0
    %866 = vmatprep.subr.bf16.mxu0 0
    %867 = vmatpush1.bf16.msra.mxu0 0
    %868 = vmatprep.subr.bf16.mxu0 0
    %869 = vmatpush1.bf16.msra.mxu0 0
    %870 = vmatprep.subr.bf16.mxu0 0
    %871 = vmatpush1.bf16.msra.mxu0 0
    %872 = vmatprep.subr.bf16.mxu0 0
    %873 = vmatpush1.bf16.msra.mxu0 0
    %874 = vmatprep.subr.bf16.mxu0 0
    %875 = vmatpush1.bf16.msra.mxu0 0
    %876 = vmatprep.subr.bf16.mxu0 0
    %877 = vmatpush1.bf16.msra.mxu0 0
    %878 = vmatprep.subr.bf16.mxu0 0
    %879 = vmatpush1.bf16.msra.mxu0 %v848
    %880 = vmatprep.subr.bf16.mxu0 0
    %881 = vmatpush2.bf16.msra.mxu0 0
    %882 = vmatprep.subr.bf16.mxu0 0
    %883 = vmatpush2.bf16.msra.mxu0 0
    %884 = vmatprep.subr.bf16.mxu0 0
    %885 = vmatpush2.bf16.msra.mxu0 0
    %886 = vmatprep.subr.bf16.mxu0 0
    %887 = vmatpush2.bf16.msra.mxu0 0
    %888 = vmatprep.subr.bf16.mxu0 0
    %889 = vmatpush2.bf16.msra.mxu0 0
    %890 = vmatprep.subr.bf16.mxu0 0
    %891 = vmatpush2.bf16.msra.mxu0 0
    %892 = vmatprep.subr.bf16.mxu0 0
    %893 = vmatpush2.bf16.msra.mxu0 0
    %894 = vmatprep.subr.bf16.mxu0 0
    %895 = vmatpush2.bf16.msra.mxu0 0
    %896 = vmatprep.mubr.bf16.mxu0 0
    %897 = vmatmul.mubr.bf16.gmra.mxu0 %v862
    %v898 = vpop.f32.mrf.mxu0
    %v899 = vadd.f32 %v859, %v898
    %v900 = vpop.f32.mrf.mxu0
    %v901 = vpop.f32.mrf.mxu0
    %v902 = vpop.f32.mrf.mxu0
    %903 = vdwg.mxu0
    %v904 = vsub.f32 0.0, %v899
    %v905 = vmul.f32 %v904, 1.442695
    %v906 = vpow.pop %v905
    %v907 = vadd.f32 %v906, 1.0
    %v908 = vrcp.pop %v907
    %v909 = vmul.f32 1.0, %v908
    %910 = vst [vmem:[#allocation3] sm:$0x1] %v909
    // Predicated region
    $region42: #{tpu_custom_call.1} parent=1 // pred_check
      _
    $region43: #{tpu_custom_call.1} parent=1 // pred_check_branch
      %912 = sbr.rel (0) target = $region45
    $region44: #{tpu_custom_call.1} parent=1 // pred_region
      %s914 = ssub.s32 16, 16
      %915 = vsyncadd [#allocation4], %s914
      %s917 = sshll.u32 [#allocation3], 4
      %s918 = int_to_ptr.vmem [resolvable:$true] %s917
      %920 = dma.vmem_to_hbm [thread:$0]  %s918, 16, %s10, [#allocation4]
    $region45: #{tpu_custom_call.1} parent=1 // pred_fallthru
      _
    // Predicated region
    $region46: #{tpu_custom_call.1} parent=1 // pred_check
      _
    $region47: #{tpu_custom_call.1} parent=1 // pred_check_branch
      %922 = sbr.rel (0) target = $region49
    $region48: #{tpu_custom_call.1} parent=1 // pred_region
      %923 = dma.done [#allocation4], 16
    $region49: #{tpu_custom_call.1} parent=1 // pred_fallthru
      _
    %924 = vsyncpa [#allocation4], 1

</llo_original>
